<compile_context>
chip_gen: v5e
topology: v5e:2x2
jax: 0.10.0
libtpu: 0.0.40
codegen_flags: <defaults>
</compile_context>

<pallas_src>
import functools

import jax
import jax.numpy as jnp
from jax import lax
from jax.experimental import pallas as pl
from jax.experimental.pallas import tpu as pltpu


def _round_up(a: int, b: int) -> int:
    return (a + b - 1) // b * b


def geglu_kernel(x_ref, w_ref, b_ref, o_ref, *, approximate=False):
    # x_ref: (tm, dim_in)    token tile, native dtype (no upcast -> native MXU path)
    # w_ref: (dim_in, 2*tn)  fused [value | gate] weight tile for this N block (resident
    #                        across the inner M grid axis)
    # b_ref: (1, 2*tn)       fused bias tile (f32)
    # o_ref: (tm, tn)        output tile (tn is a multiple of 128)
    tn = o_ref.shape[-1]

    # Single MXU matmul for both halves; f32 accumulation.
    hg = jnp.dot(x_ref[...], w_ref[...], preferred_element_type=jnp.float32)
    hg = hg + b_ref[...].astype(jnp.float32)

    h = hg[:, :tn]   # value half (split lands on a 128-lane tile boundary)
    g = hg[:, tn:]   # gate half

    if approximate:
        # tanh-approx GELU: tanh runs on the EUP (separate VLIW slot, hidden behind the
        # MXU). Numerics differ slightly from torch's default erf GELU.
        c = jnp.float32(0.7978845608028654)
        gelu_g = 0.5 * g * (1.0 + jnp.tanh(c * (g + 0.044715 * g * g * g)))
    else:
        # Exact GELU (erf form) to match torch.nn.functional.gelu's default.
        inv_sqrt2 = jnp.float32(0.7071067811865476)
        gelu_g = 0.5 * g * (1.0 + lax.erf(g * inv_sqrt2))

    o_ref[...] = (h * gelu_g).astype(o_ref.dtype)


def prepare_geglu_params(weight, bias, *, tn=512, compute_dtype=None):
    """Re-lay out PyTorch Linear params (weight: (2*dim_out, dim_in), bias: (2*dim_out,))
    into the fused, N-tiled slab the kernel consumes.

    Pure parameter reshuffling — call once at parameter-load time (or let jit constant-fold
    it); do NOT re-run per forward.
    """
    two_dim_out, dim_in = weight.shape
    dim_out = two_dim_out // 2

    tn_eff = min(tn, _round_up(dim_out, 128))     # lane-dense N tile
    dim_out_p = _round_up(dim_out, tn_eff)        # pad so the N grid divides evenly
    n_n = dim_out_p // tn_eff
    pad = dim_out_p - dim_out

    wx = weight[:dim_out, :].T                    # (dim_in, dim_out)  value half
    wg = weight[dim_out:, :].T                    # (dim_in, dim_out)  gate half
    bx = bias[:dim_out]
    bg = bias[dim_out:]
    if pad:
        wx = jnp.pad(wx, ((0, 0), (0, pad)))
        wg = jnp.pad(wg, ((0, 0), (0, pad)))
        bx = jnp.pad(bx, ((0, pad),))
        bg = jnp.pad(bg, ((0, pad),))

    # Per N-tile layout: [ value cols | gate cols ] so one (dim_in, 2*tn) block = one matmul.
    w_fused = jnp.concatenate(
        [wx.reshape(dim_in, n_n, tn_eff), wg.reshape(dim_in, n_n, tn_eff)], axis=-1
    ).reshape(dim_in, n_n * 2 * tn_eff)
    b_fused = jnp.concatenate(
        [bx.reshape(n_n, tn_eff), bg.reshape(n_n, tn_eff)], axis=-1
    ).reshape(1, n_n * 2 * tn_eff).astype(jnp.float32)

    if compute_dtype is not None:
        # Feed the MXU in the activation dtype (bf16 activations -> bf16 weights, f32 accum).
        w_fused = w_fused.astype(compute_dtype)

    return w_fused, b_fused, dim_out, dim_out_p, tn_eff


def geglu_apply(x, w_fused, b_fused, dim_out, dim_out_p, tn, *, tm=512,
                approximate_gelu=False):
    dim_in = x.shape[-1]
    lead = x.shape[:-1]
    x2d = x.reshape(-1, dim_in)
    M = x2d.shape[0]

    w = w_fused if w_fused.dtype == x.dtype else w_fused.astype(x.dtype)
    itemsize = jnp.dtype(x.dtype).itemsize

    # Clamp M tile to the dtype's sublane multiple (f32:8, bf16:16, 8-bit:32).
    sub = {4: 8, 2: 16, 1: 32}.get(itemsize, 8)
    tm_eff = min(tm, _round_up(M, sub))

    n_m = pl.cdiv(M, tm_eff)       # ragged last M tile handled by partial-block masking
    n_n = dim_out_p // tn

    # Double-buffered VMEM footprint (x, w, bias, out) + f32 intermediate, with headroom.
    vmem_est = (2 * tm_eff * dim_in * itemsize
                + 2 * dim_in * 2 * tn * itemsize
                + 2 * 2 * tn * 4
                + 2 * tm_eff * tn * itemsize
                + 2 * tm_eff * 2 * tn * 4)
    vmem_limit = int(min(max(2 * vmem_est, 32 << 20), 64 << 20))

    cost = pl.CostEstimate(
        flops=2 * M * dim_in * 2 * dim_out_p,
        transcendentals=M * dim_out_p,
        bytes_accessed=(n_n * M * dim_in * itemsize          # x re-streamed once per N tile
                        + dim_in * 2 * dim_out_p * itemsize  # fused weight: single pass
                        + 2 * dim_out_p * 4                  # bias
                        + M * dim_out * itemsize),           # output
    )

    kernel = functools.partial(geglu_kernel, approximate=approximate_gelu)

    # Grid order: N outer, M inner -> weight/bias tiles stay resident in VMEM across the
    # whole inner M sweep; only the (smaller) activation stream is re-read n_n times.
    out2d = pl.pallas_call(
        kernel,
        out_shape=jax.ShapeDtypeStruct((M, dim_out), x.dtype),
        grid_spec=pltpu.PrefetchScalarGridSpec(
            num_scalar_prefetch=0,
            grid=(n_n, n_m),
            in_specs=[
                pl.BlockSpec((tm_eff, dim_in), lambda j, i: (i, 0)),   # x: varies on inner M
                pl.BlockSpec((dim_in, 2 * tn), lambda j, i: (0, j)),   # w: outer-only -> resident
                pl.BlockSpec((1, 2 * tn), lambda j, i: (0, j)),        # bias: outer-only
            ],
            out_specs=pl.BlockSpec((tm_eff, tn), lambda j, i: (i, j)),
        ),
        compiler_params=pltpu.CompilerParams(
            # N "parallel" so megacore (v7x) shards disjoint weight tiles per core;
            # M "arbitrary" keeps the weight-resident inner sweep sequential.
            dimension_semantics=("parallel", "arbitrary"),
            vmem_limit_bytes=vmem_limit,
        ),
        cost_estimate=cost,
    )(x2d, w, b_fused)

    return out2d.reshape(*lead, dim_out)


def geglu(x, weight, bias, *, tm=512, tn=512, approximate_gelu=False):
    """x: (..., dim_in); weight: (2*dim_out, dim_in) (PyTorch Linear layout); bias: (2*dim_out,).
    In a real model, hoist prepare_geglu_params() to parameter-load time."""
    w_fused, b_fused, dim_out, dim_out_p, tn_eff = prepare_geglu_params(
        weight, bias, tn=tn, compute_dtype=x.dtype)
    return geglu_apply(x, w_fused, b_fused, dim_out, dim_out_p, tn_eff, tm=tm,
                       approximate_gelu=approximate_gelu)


def geglu_ref(x, weight, bias):
    """Pure-JAX reference reproducing the PyTorch forward."""
    proj = jnp.einsum("...i,oi->...o", x, weight) + bias
    dim_out = weight.shape[0] // 2
    h, g = proj[..., :dim_out], proj[..., dim_out:]
    return h * (0.5 * g * (1.0 + lax.erf(g / jnp.sqrt(2.0))))


if __name__ == "__main__":
    key = jax.random.PRNGKey(0)
    k_x, k_w, k_b, k_x2, k_w2, k_b2 = jax.random.split(key, 6)

    # Case 1: small f32 (matches the module's forward at toy sizes).
    batch, seq, dim_in, dim_out = 2, 8, 32, 32
    x = jax.random.normal(k_x, (batch, seq, dim_in), dtype=jnp.float32)
    # Deterministic synthetic Linear params (PyTorch layout: weight [2*dim_out, dim_in]).
    weight = jax.random.normal(k_w, (2 * dim_out, dim_in), dtype=jnp.float32) * 0.05
    bias = jax.random.normal(k_b, (2 * dim_out,), dtype=jnp.float32) * 0.05

    out = jax.block_until_ready(geglu(x, weight, bias))
    ref = geglu_ref(x, weight, bias)
    assert out.shape == (batch, seq, dim_out)
    assert jnp.allclose(out, ref, atol=1e-5, rtol=1e-5), float(jnp.max(jnp.abs(out - ref)))

    # Case 2: bf16 activations, ragged M (not a sublane/tile multiple) and dim_out not a
    # multiple of 128 -> exercises partial-block masking on both output axes.
    b2, s2, din2, dout2 = 2, 50, 160, 192
    x2 = jax.random.normal(k_x2, (b2, s2, din2), dtype=jnp.float32)
    w2 = jax.random.normal(k_w2, (2 * dout2, din2), dtype=jnp.float32) * 0.05
    bi2 = jax.random.normal(k_b2, (2 * dout2,), dtype=jnp.float32) * 0.05

    out2 = jax.block_until_ready(geglu(x2.astype(jnp.bfloat16), w2, bi2))
    ref2 = geglu_ref(x2.astype(jnp.bfloat16).astype(jnp.float32),
                     w2.astype(jnp.bfloat16).astype(jnp.float32), bi2)
    assert out2.shape == (b2, s2, dout2)
    err2 = float(jnp.max(jnp.abs(out2.astype(jnp.float32) - ref2)))
    assert err2 < 2e-2, err2

    print("KERNEL_OK")
</pallas_src>

<mosaic_0001>
module attributes {stable_mosaic.version = 11 : i64} {
  func.func @geglu_kernel(%arg0: i32, %arg1: i32, %arg2: memref<16x32xf32, #tpu.memory_space<vmem>>, %arg3: memref<32x256xf32, #tpu.memory_space<vmem>>, %arg4: memref<1x256xf32, #tpu.memory_space<vmem>>, %arg5: memref<16x128xf32, #tpu.memory_space<vmem>>) attributes {dimension_semantics = [#tpu.dimension_semantics<parallel>, #tpu.dimension_semantics<arbitrary>], iteration_bounds = array<i64: 1, 1>, scalar_prefetch = 0 : i64, scratch_operands = 0 : i64, tpu.core_type = #tpu.core_type<tc>, window_params = [{transform_indices = @transform_0, window_bounds = array<i64: 16, 32>}, {transform_indices = @transform_1, window_bounds = array<i64: 32, 256>}, {transform_indices = @transform_2, window_bounds = array<i64: 1, 256>}, {transform_indices = @transform_3, window_bounds = array<i64: 16, 128>}]} {
    %c0 = arith.constant 0 : index
    %c0_0 = arith.constant 0 : index
    %0 = vector.load %arg2[%c0, %c0_0] : memref<16x32xf32, #tpu.memory_space<vmem>>, vector<16x32xf32>
    %c0_1 = arith.constant 0 : index
    %c0_2 = arith.constant 0 : index
    %1 = vector.load %arg3[%c0_1, %c0_2] : memref<32x256xf32, #tpu.memory_space<vmem>>, vector<32x256xf32>
    %cst = arith.constant dense<0.000000e+00> : vector<16x256xf32>
    %2 = tpu.matmul %0, %1, %cst {dimension_numbers = #tpu.dot_dimension_numbers<[1], [0], [0], [1], [0, 0, 1, 1], [], []>} : vector<16x32xf32>, vector<32x256xf32>, vector<16x256xf32> -> vector<16x256xf32>
    %c0_3 = arith.constant 0 : index
    %c0_4 = arith.constant 0 : index
    %3 = vector.load %arg4[%c0_3, %c0_4] : memref<1x256xf32, #tpu.memory_space<vmem>>, vector<1x256xf32>
    %4 = vector.broadcast %3 : vector<1x256xf32> to vector<16x256xf32>
    %5 = arith.addf %2, %4 : vector<16x256xf32>
    %6 = vector.extract_strided_slice %5 {offsets = [0, 0], sizes = [16, 128], strides = [1, 1]} : vector<16x256xf32> to vector<16x128xf32>
    %7 = vector.extract_strided_slice %5 {offsets = [0, 128], sizes = [16, 128], strides = [1, 1]} : vector<16x256xf32> to vector<16x128xf32>
    %cst_5 = arith.constant 5.000000e-01 : f32
    %8 = vector.broadcast %cst_5 : f32 to vector<16x128xf32>
    %9 = arith.mulf %8, %7 : vector<16x128xf32>
    %cst_6 = arith.constant 0.707106769 : f32
    %10 = vector.broadcast %cst_6 : f32 to vector<16x128xf32>
    %11 = arith.mulf %7, %10 : vector<16x128xf32>
    %12 = math.erf %11 : vector<16x128xf32>
    %cst_7 = arith.constant 1.000000e+00 : f32
    %13 = vector.broadcast %cst_7 : f32 to vector<16x128xf32>
    %14 = arith.addf %13, %12 : vector<16x128xf32>
    %15 = arith.mulf %9, %14 : vector<16x128xf32>
    %16 = arith.mulf %6, %15 : vector<16x128xf32>
    %c0_8 = arith.constant 0 : index
    %c0_9 = arith.constant 0 : index
    %17 = vector.load %arg5[%c0_8, %c0_9] : memref<16x128xf32, #tpu.memory_space<vmem>>, vector<16x128xf32>
    tpu.vector_store %arg5[%c0_8, %c0_9], %16 {strides = array<i32>} : memref<16x128xf32, #tpu.memory_space<vmem>>, vector<16x128xf32>,
    return
  }
  func.func @transform_0(%arg0: i32, %arg1: i32) -> (i32, i32) {
    %c0_i32 = arith.constant 0 : i32
    %c0_i32_0 = arith.constant 0 : i32
    return %arg1, %c0_i32 : i32, i32
  }
  func.func @transform_1(%arg0: i32, %arg1: i32) -> (i32, i32) {
    %c0_i32 = arith.constant 0 : i32
    %c0_i32_0 = arith.constant 0 : i32
    return %c0_i32, %arg0 : i32, i32
  }
  func.func @transform_2(%arg0: i32, %arg1: i32) -> (i32, i32) {
    %c0_i32 = arith.constant 0 : i32
    %c0_i32_0 = arith.constant 0 : i32
    return %c0_i32, %arg0 : i32, i32
  }
  func.func @transform_3(%arg0: i32, %arg1: i32) -> (i32, i32) {
    %c0_i32 = arith.constant 0 : i32
    return %arg1, %arg0 : i32, i32
  }
}

</mosaic_0001>

<llo_original>
// kernel: tpu_custom_call.1
$region0: #{tpu_custom_call.1}
  #allocation0 [shape = 'u32[]', space=smem, size = 0x4, offset = 0x4, fixed_abs, tag = 'smem constant byte address 0x4 - core index']
  #allocation1 [shape = 'u32[72,128]{1,0:T(1,128)}', space=vmem, size = 0x9000, scoped, tag = 'internal scratch']
  %s0 = inlined_call_operand.hbm [shape: f32[16,32], index: 0, kind: input, shape index: {}]
  %s1 = inlined_call_operand.hbm [shape: f32[32,256], index: 1, kind: input, shape index: {}]
  %s2 = inlined_call_operand.hbm [shape: f32[1,256], index: 2, kind: input, shape index: {}]
  %s3 = inlined_call_operand.hbm [shape: f32[16,32], index: 3, kind: output, shape index: {}]
  %s4 = sld [smem:[#allocation0]]
  $region34: #{tpu_custom_call.1} parent=0
    _
  %s6 = ssub.s32 1, %s4
  %s7 = scalar_select 0, %s6, %s4
  $region1: #{tpu_custom_call.1} parent=0
    #allocation2 [shape = 'u8[8192]{0}', space=vmem, size = 0x2000, scoped, tag = 'input window, operand 0, single buffered']
    #allocation3 [shape = 's32[1]{0}', space=sflag, size = 0x4, scoped, tag = 'scoped memory for tpu_custom_call.1']
    #allocation4 [shape = 's32[1]{0}', space=sflag, size = 0x4, scoped, tag = 'scoped memory for tpu_custom_call.1']
    #allocation5 [shape = 'u8[32768]{0}', space=vmem, size = 0x8000, scoped, tag = 'input window, operand 1, single buffered']
    #allocation6 [shape = 's32[1]{0}', space=sflag, size = 0x4, scoped, tag = 'scoped memory for tpu_custom_call.1']
    #allocation7 [shape = 'u8[1024]{0}', space=vmem, size = 0x400, scoped, tag = 'input window, operand 2, single buffered']
    #allocation8 [shape = 'u8[8192]{0}', space=vmem, size = 0x2000, scoped, tag = 'output window, operand 0, single buffered']
    %8 = vsyncpa [#allocation3], 0
    %9 = vsyncpa [#allocation6], 0
    %10 = vsyncpa [#allocation4], 0
    // Predicated region
    $region2: #{tpu_custom_call.1} parent=1 // pred_check
      _
    $region3: #{tpu_custom_call.1} parent=1 // pred_check_branch
      %12 = sbr.rel (0) target = $region5
    $region4: #{tpu_custom_call.1} parent=1 // pred_region
      %14 = vsyncadd [#allocation3], 0
      %s15 = sshll.u32 %s0, 4
      %s16 = int_to_ptr.hbm [resolvable:$true] %s15
      %s17 = sshll.u32 [#allocation2], 4
      %s18 = int_to_ptr.vmem [resolvable:$true] %s17
      %23 = dma.hbm_to_vmem [thread:$0]  %s16, 256, %s18, [#allocation3], 128, 128, 8
    $region5: #{tpu_custom_call.1} parent=1 // pred_fallthru
      _
    // Predicated region
    $region6: #{tpu_custom_call.1} parent=1 // pred_check
      _
    $region7: #{tpu_custom_call.1} parent=1 // pred_check_branch
      %25 = sbr.rel (0) target = $region9
    $region8: #{tpu_custom_call.1} parent=1 // pred_region
      %27 = vsyncadd [#allocation6], 0
      %s28 = sshll.u32 %s1, 4
      %s29 = int_to_ptr.hbm [resolvable:$true] %s28
      %s30 = sshll.u32 [#allocation5], 4
      %s31 = int_to_ptr.vmem [resolvable:$true] %s30
      %36 = dma.hbm_to_vmem [thread:$0]  %s29, 1024, %s31, [#allocation6], 256, 256, 16
    $region9: #{tpu_custom_call.1} parent=1 // pred_fallthru
      _
    // Predicated region
    $region10: #{tpu_custom_call.1} parent=1 // pred_check
      _
    $region11: #{tpu_custom_call.1} parent=1 // pred_check_branch
      %38 = sbr.rel (0) target = $region13
    $region12: #{tpu_custom_call.1} parent=1 // pred_region
      %40 = vsyncadd [#allocation6], 0
      %s42 = sshll.u32 %s2, 4
      %s43 = int_to_ptr.hbm [resolvable:$true] %s42
      %s44 = sshll.u32 [#allocation7], 4
      %s45 = int_to_ptr.vmem [resolvable:$true] %s44
      %47 = dma.hbm_to_vmem [thread:$0]  %s43, 32, %s45, [#allocation6]
    $region13: #{tpu_custom_call.1} parent=1 // pred_fallthru
      _
    // Predicated region
    $region14: #{tpu_custom_call.1} parent=1 // pred_check
      _
    $region15: #{tpu_custom_call.1} parent=1 // pred_check_branch
      %49 = sbr.rel (0) target = $region17
    $region16: #{tpu_custom_call.1} parent=1 // pred_region
      %51 = dma.done [#allocation3], 256
    $region17: #{tpu_custom_call.1} parent=1 // pred_fallthru
      _
    // Predicated region
    $region18: #{tpu_custom_call.1} parent=1 // pred_check
      _
    $region19: #{tpu_custom_call.1} parent=1 // pred_check_branch
      %53 = sbr.rel (0) target = $region21
    $region20: #{tpu_custom_call.1} parent=1 // pred_region
      %55 = dma.done [#allocation6], 1024
    $region21: #{tpu_custom_call.1} parent=1 // pred_fallthru
      _
    // Predicated region
    $region22: #{tpu_custom_call.1} parent=1 // pred_check
      _
    $region23: #{tpu_custom_call.1} parent=1 // pred_check_branch
      %57 = sbr.rel (0) target = $region25
    $region24: #{tpu_custom_call.1} parent=1 // pred_region
      %59 = dma.done [#allocation6], 32
    $region25: #{tpu_custom_call.1} parent=1 // pred_fallthru
      _
    %v60 = vld [vmem:[#allocation2] sm:$0xff]
    %v61 = vld [vmem:[#allocation2 + $0x8] sm:$0xff]
    %v62 = vld [vmem:[#allocation5] sm:$0xff]
    %v63 = vld [vmem:[#allocation5 + $0x8] sm:$0xff]
    %v64 = vld [vmem:[#allocation5 + $0x10] sm:$0xff]
    %v65 = vld [vmem:[#allocation5 + $0x18] sm:$0xff]
    %v66 = vld [vmem:[#allocation5 + $0x20] sm:$0xff]
    %v67 = vld [vmem:[#allocation5 + $0x28] sm:$0xff]
    %v68 = vld [vmem:[#allocation5 + $0x30] sm:$0xff]
    %v69 = vld [vmem:[#allocation5 + $0x38] sm:$0xff]
    %v70 = vld [vmem:[#allocation7] sm:$0x3]
    %v72 = vperm.slane %v70, 0
    %v73 = vperm.slane %v70, 1
    %vm76 = vcmask 261120
    %v78 = vsel %vm76, %v60, 0
    %v81 = vsel %vm76, %v61, 0
    %83 = vmatpush.msra.mxu0 0.0
    %84 = vmatpush.msra.mxu0 0.0
    %85 = vmatpush.msra.mxu0 0.0
    %86 = vmatpush.msra.mxu0 0.0
    %87 = vmatpush.msra.mxu0 0.0
    %88 = vmatpush.msra.mxu0 0.0
    %89 = vmatpush.msra.mxu0 0.0
    %90 = vmatpush.msra.mxu0 0.0
    %91 = vmatpush.msra.mxu0 0.0
    %92 = vmatpush.msra.mxu0 0.0
    %93 = vmatpush.msra.mxu0 0.0
    %94 = vmatpush.msra.mxu0 0.0
    %95 = vmatpush.msra.mxu0 %v68
    %96 = vmatpush.msra.mxu0 %v66
    %97 = vmatpush.msra.mxu0 %v64
    %98 = vmatpush.msra.mxu0 %v62
    %99 = vmatmul.f32.gmra.mxu0 %v78
    %v100 = vpop.f32.mrf.mxu0
    %v101 = vadd.f32 %v72, %v100
    %102 = vmatmul.f32.gmra.mxu0 %v81
    %v103 = vpop.f32.mrf.mxu0
    %v104 = vadd.f32 %v72, %v103
    %105 = vdwg.mxu0
    %106 = vmatpush.msra.mxu0 0.0
    %107 = vmatpush.msra.mxu0 0.0
    %108 = vmatpush.msra.mxu0 0.0
    %109 = vmatpush.msra.mxu0 0.0
    %110 = vmatpush.msra.mxu0 0.0
    %111 = vmatpush.msra.mxu0 0.0
    %112 = vmatpush.msra.mxu0 0.0
    %113 = vmatpush.msra.mxu0 0.0
    %114 = vmatpush.msra.mxu0 0.0
    %115 = vmatpush.msra.mxu0 0.0
    %116 = vmatpush.msra.mxu0 0.0
    %117 = vmatpush.msra.mxu0 0.0
    %118 = vmatpush.msra.mxu0 %v69
    %119 = vmatpush.msra.mxu0 %v67
    %120 = vmatpush.msra.mxu0 %v65
    %121 = vmatpush.msra.mxu0 %v63
    %122 = vmatmul.f32.gmra.mxu0 %v78
    %v123 = vpop.f32.mrf.mxu0
    %v124 = vadd.f32 %v73, %v123
    %125 = vmatmul.f32.gmra.mxu0 %v81
    %v126 = vpop.f32.mrf.mxu0
    %v127 = vadd.f32 %v73, %v126
    %128 = vdwg.mxu0
    %v129 = vmul.f32 %v124, 0.5
    %v130 = vmul.f32 %v127, 0.5
    %v131 = vmul.f32 %v124, 0.70710677
    %v132 = vmul.f32 %v127, 0.70710677
    %v133 = vmul.f32 %v131, %v131
    %v134 = vmin.f32 16.0, %v133
    %v135 = vmul.f32 %v134, 2.1237322e-06
    %v136 = vadd.f32 %v135, 0.00028619796
    %v137 = vmul.f32 %v134, %v136
    %v138 = vadd.f32 %v137, 0.0036580483
    %v139 = vmul.f32 %v134, %v138
    %v140 = vadd.f32 %v139, 0.05243302
    %v141 = vmul.f32 %v134, %v140
    %v142 = vadd.f32 %v141, 0.18741608
    %v143 = vmul.f32 %v134, %v142
    %v144 = vadd.f32 %v143, 1.1283791
    %v145 = vmul.f32 %v131, %v144
    %v146 = vmul.f32 %v134, 3.8918573e-05
    %v147 = vadd.f32 %v146, 0.001143296
    %v148 = vmul.f32 %v134, %v147
    %v149 = vadd.f32 %v148, 0.014752088
    %v150 = vmul.f32 %v134, %v149
    %v151 = vadd.f32 %v150, 0.112945676
    %v152 = vmul.f32 %v134, %v151
    %v153 = vadd.f32 %v152, 0.4994258
    %v154 = vmul.f32 %v134, %v153
    %v155 = vadd.f32 %v154, 1.0
    %v156 = vrcp.pop %v155
    %v157 = vmul.f32 %v155, %v156
    %v158 = vsub.f32 1.0, %v157
    %v159 = vmul.f32 %v156, %v158
    %v160 = vadd.f32 %v156, %v159
    %vm161 = vweird.f32 %v155
    %vm162 = vweird.f32 %v156
    %vm163 = vmor %vm161, %vm162
    %v164 = vsel %vm163, %v156, %v160
    %v165 = vand.u32 2147483647, %v155
    %vm166 = vcmp.eq.f32.partialorder %v165, 8.507059e+37
    %v167 = vand.u32 %v155, 2147483648
    %v168 = vor.u32 1.1754944e-38, %v167
    %v169 = vsel %vm166, %v168, %v164
    %v170 = vmul.f32 %v145, %v169
    %v171 = vmin.f32 %v170, 1.0
    %v172 = vmax.f32 %v171, -1.0
    %v173 = vmul.f32 %v132, %v132
    %v174 = vmin.f32 16.0, %v173
    %v175 = vmul.f32 %v174, 2.1237322e-06
    %v176 = vadd.f32 %v175, 0.00028619796
    %v177 = vmul.f32 %v174, %v176
    %v178 = vadd.f32 %v177, 0.0036580483
    %v179 = vmul.f32 %v174, %v178
    %v180 = vadd.f32 %v179, 0.05243302
    %v181 = vmul.f32 %v174, %v180
    %v182 = vadd.f32 %v181, 0.18741608
    %v183 = vmul.f32 %v174, %v182
    %v184 = vadd.f32 %v183, 1.1283791
    %v185 = vmul.f32 %v132, %v184
    %v186 = vmul.f32 %v174, 3.8918573e-05
    %v187 = vadd.f32 %v186, 0.001143296
    %v188 = vmul.f32 %v174, %v187
    %v189 = vadd.f32 %v188, 0.014752088
    %v190 = vmul.f32 %v174, %v189
    %v191 = vadd.f32 %v190, 0.112945676
    %v192 = vmul.f32 %v174, %v191
    %v193 = vadd.f32 %v192, 0.4994258
    %v194 = vmul.f32 %v174, %v193
    %v195 = vadd.f32 %v194, 1.0
    %v196 = vrcp.pop %v195
    %v197 = vmul.f32 %v195, %v196
    %v198 = vsub.f32 1.0, %v197
    %v199 = vmul.f32 %v196, %v198
    %v200 = vadd.f32 %v196, %v199
    %vm201 = vweird.f32 %v195
    %vm202 = vweird.f32 %v196
    %vm203 = vmor %vm201, %vm202
    %v204 = vsel %vm203, %v196, %v200
    %v205 = vand.u32 2147483647, %v195
    %vm206 = vcmp.eq.f32.partialorder %v205, 8.507059e+37
    %v207 = vand.u32 %v195, 2147483648
    %v208 = vor.u32 1.1754944e-38, %v207
    %v209 = vsel %vm206, %v208, %v204
    %v210 = vmul.f32 %v185, %v209
    %v211 = vmin.f32 %v210, 1.0
    %v212 = vmax.f32 %v211, -1.0
    %v213 = vadd.f32 %v172, 1.0
    %v214 = vadd.f32 %v212, 1.0
    %v215 = vmul.f32 %v129, %v213
    %v216 = vmul.f32 %v130, %v214
    %v217 = vmul.f32 %v101, %v215
    %v218 = vmul.f32 %v104, %v216
    %219 = vst [vmem:[#allocation8] sm:$0xff] %v217
    %220 = vst [vmem:[#allocation8 + $0x8] sm:$0xff] %v218
    // Predicated region
    $region26: #{tpu_custom_call.1} parent=1 // pred_check
      _
    $region27: #{tpu_custom_call.1} parent=1 // pred_check_branch
      %222 = sbr.rel (0) target = $region29
    $region28: #{tpu_custom_call.1} parent=1 // pred_region
      %224 = vsyncadd [#allocation4], 0
      %s225 = sshll.u32 [#allocation8], 4
      %s226 = int_to_ptr.vmem [resolvable:$true] %s225
      %s227 = sshll.u32 %s3, 4
      %s228 = int_to_ptr.hbm [resolvable:$true] %s227
      %233 = dma.vmem_to_hbm [thread:$0]  %s226, 256, %s228, [#allocation4], 128, 128, 8
    $region29: #{tpu_custom_call.1} parent=1 // pred_fallthru
      _
    // Predicated region
    $region30: #{tpu_custom_call.1} parent=1 // pred_check
      _
    $region31: #{tpu_custom_call.1} parent=1 // pred_check_branch
      %235 = sbr.rel (0) target = $region33
    $region32: #{tpu_custom_call.1} parent=1 // pred_region
      %237 = dma.done [#allocation4], 256
    $region33: #{tpu_custom_call.1} parent=1 // pred_fallthru
      _
    %238 = vsyncpa [#allocation3], 1
    %239 = vsyncpa [#allocation6], 1
    %240 = vsyncpa [#allocation4], 1

</llo_original>
